<compile_context>
chip_gen: v5e
topology: v5e:2x2
jax: 0.10.0
libtpu: 0.0.40
codegen_flags: <defaults>
</compile_context>

<pallas_src>
import functools

import jax
import jax.numpy as jnp
from jax import lax
from jax.experimental import pallas as pl
from jax.experimental.pallas import tpu as pltpu


def _round_up(x, m):
    return ((x + m - 1) // m) * m


def mentor_kernel(loss_ref, label_ref, w1_ref, b1_ref, weff_ref, beff_ref,
                  o_ref, *, chunk):
    """One lane tile: logit = w_eff . tanh(w1_eff @ [loss;label] + b1_eff) + b_eff."""
    tn = o_ref.shape[1]
    n_chunks = tn // chunk

    # Hoist the resident-operand reads (and their implicit broadcasts) out of
    # the chunk loop.
    w1a = w1_ref[:, 0:1]          # (H, 1)  loss column of folded layer-1 weight
    w1b = w1_ref[:, 1:2]          # (H, 1)  label column
    b1 = b1_ref[...]              # (H, 1)
    weff = weff_ref[...]          # (H, 1)  folded layer-2/3 weight
    beff = beff_ref[...]          # (1, 1)  folded layer-2/3 bias

    def body(c, carry):
        off = pl.multiple_of(c * chunk, chunk)
        l = loss_ref[:, pl.ds(off, chunk)]     # (1, chunk)
        t = label_ref[:, pl.ds(off, chunk)]    # (1, chunk)
        # Layer 1 (in=2 -> H): two broadcast FMAs on the VPU + tanh on the EUP.
        h = jnp.tanh(w1a * l + w1b * t + b1)   # (H, chunk)
        # Folded layers 2+3: weighted sublane reduction (VPU mul + XLU reduce).
        logit = jnp.sum(weff * h, axis=0, keepdims=True) + beff   # (1, chunk)
        o_ref[:, pl.ds(off, chunk)] = jax.nn.sigmoid(logit)
        return carry

    lax.fori_loop(0, n_chunks, body, 0, unroll=True)


def _choose_tiles(n, tile_n, chunk):
    """Pick (chunk, tile, padded_n). Tile is a multiple of `chunk`, and we make
    at least two tiles whenever there is enough work so both v7x TensorCores
    get a share of the 'parallel' grid axis."""
    chunk = max(128, _round_up(chunk, 128))
    total_chunks = pl.cdiv(max(n, 1), chunk)
    max_per_tile = max(1, tile_n // chunk)
    if total_chunks >= 2:
        per_tile = min(max_per_tile, pl.cdiv(total_chunks, 2))
    else:
        per_tile = 1
    tn = per_tile * chunk
    n_pad = _round_up(n, tn)
    return chunk, tn, n_pad


def mentor_forward(loss, true_label, params, *, tile_n=16384, chunk=512):
    """loss, true_label: (1, N, 1) float32. Returns weight of shape (1, N, 1)."""
    assert loss.shape == true_label.shape
    assert loss.ndim == 3 and loss.shape[0] == 1 and loss.shape[-1] == 1
    n = loss.shape[1]
    h_dim = params["w1"].shape[0]

    loss2 = loss.reshape(1, n).astype(jnp.float32)          # (1, N) lane-dense
    label2 = true_label.reshape(1, n).astype(jnp.float32)   # (1, N)

    # ---- Global per-feature stats (4 scalars, plain XLA; unbiased like torch.std)
    denom = jnp.float32(n - 1)
    m_l = jnp.mean(loss2)
    m_t = jnp.mean(label2)
    inv_l = 1.0 / jnp.sqrt(jnp.sum((loss2 - m_l) ** 2) / denom)
    inv_t = 1.0 / jnp.sqrt(jnp.sum((label2 - m_t) ** 2) / denom)

    # ---- Fold standardization into layer 1 (exact algebra):
    #   w1 @ ((x - mean) * inv_std) + b1 == (w1 * inv_std) @ x + (b1 - (w1*inv_std) @ mean)
    inv_std_row = jnp.stack([inv_l, inv_t]).reshape(1, 2)    # (1, 2)
    mean_col = jnp.stack([m_l, m_t]).reshape(2, 1)           # (2, 1)
    w1_eff = params["w1"] * inv_std_row                      # (H, 2)
    b1_eff = params["b1"] - w1_eff @ mean_col                # (H, 1)

    # ---- Fold layers 2 + 3 (no nonlinearity between them):
    #   w3.T @ (w2 @ h + b2) + b3 == (w2.T @ w3).T-reduce(h) + (w3.T @ b2 + b3)
    w_eff = params["w2"].T @ params["w3"]                    # (H, 1)
    b_eff = params["w3"].T @ params["b2"] + params["b3"]     # (1, 1)

    # ---- Tiling over the lane (sample) axis.
    chunk, tn, n_pad = _choose_tiles(n, tile_n, chunk)
    loss_p = jnp.pad(loss2, ((0, 0), (0, n_pad - n)))
    label_p = jnp.pad(label2, ((0, 0), (0, n_pad - n)))

    resident = lambda i: (0, 0)   # weights / biases stay on block (0, 0)
    out = pl.pallas_call(
        functools.partial(mentor_kernel, chunk=chunk),
        out_shape=jax.ShapeDtypeStruct((1, n_pad), jnp.float32),
        grid=(n_pad // tn,),
        in_specs=[
            pl.BlockSpec((1, tn), lambda i: (0, i)),     # loss (streamed)
            pl.BlockSpec((1, tn), lambda i: (0, i)),     # label (streamed)
            pl.BlockSpec((h_dim, 2), resident),          # w1_eff
            pl.BlockSpec((h_dim, 1), resident),          # b1_eff
            pl.BlockSpec((h_dim, 1), resident),          # w_eff
            pl.BlockSpec((1, 1), resident),              # b_eff
        ],
        out_specs=pl.BlockSpec((1, tn), lambda i: (0, i)),
        compiler_params=pltpu.CompilerParams(
            dimension_semantics=("parallel",)),          # 2-TC sharding on v7x
    )(loss_p, label_p, w1_eff, b1_eff, w_eff, b_eff)

    return out[:, :n].reshape(1, n, 1)


def init_params(key, input_dim=2, hidden_dim=32):
    """PyTorch-style init U(-1/sqrt(fan_in), 1/sqrt(fan_in)), stored in the
    transposed (feature-major) kernel layout."""
    def uniform(k, shape, fan_in):
        bound = 1.0 / jnp.sqrt(jnp.float32(fan_in))
        return jax.random.uniform(k, shape, jnp.float32, -bound, bound)

    k = jax.random.split(key, 6)
    return dict(
        w1=uniform(k[0], (hidden_dim, input_dim), input_dim),     # (H, 2)
        b1=uniform(k[1], (hidden_dim, 1), input_dim),             # (H, 1)
        w2=uniform(k[2], (hidden_dim, hidden_dim), hidden_dim),   # (H, H)
        b2=uniform(k[3], (hidden_dim, 1), hidden_dim),            # (H, 1)
        w3=uniform(k[4], (hidden_dim, 1), hidden_dim),            # (H, 1)
        b3=uniform(k[5], (1, 1), hidden_dim),                     # (1, 1)
    )


def mentor_reference(loss, true_label, params):
    """Pure-JAX reference mirroring the PyTorch forward (B=1, unbiased std)."""
    x = jnp.concatenate([loss, true_label], axis=-1)               # (1, N, 2)
    mean = jnp.mean(x, axis=1)                                     # (1, 2)
    std = jnp.std(x, axis=1, ddof=1)                               # (1, 2)
    x = (x - mean[:, None, :]) / std[:, None, :]
    h = jnp.tanh(x @ params["w1"].T + params["b1"][:, 0])          # (1, N, H)
    h = h @ params["w2"].T + params["b2"][:, 0]
    return jax.nn.sigmoid(h @ params["w3"] + params["b3"][0])      # (1, N, 1)


if __name__ == "__main__":
    key = jax.random.PRNGKey(0)
    k_loss, k_params = jax.random.split(key)

    N, HIDDEN = 1000, 32
    loss = jax.random.normal(k_loss, (1, N, 1), jnp.float32) ** 2   # loss-like
    # Alternating 0/1 labels: deterministic and guarantees nonzero feature std.
    true_label = (jnp.arange(N, dtype=jnp.int32) % 2).astype(jnp.float32)
    true_label = true_label.reshape(1, N, 1)

    params = init_params(k_params, input_dim=2, hidden_dim=HIDDEN)

    out = jax.block_until_ready(mentor_forward(loss, true_label, params))
    ref = mentor_reference(loss, true_label, params)

    assert out.shape == (1, N, 1), out.shape
    assert bool(jnp.all(jnp.isfinite(out)))
    assert bool(jnp.allclose(out, ref, atol=1e-5, rtol=1e-5)), \
        float(jnp.max(jnp.abs(out - ref)))
    print("KERNEL_OK")
</pallas_src>

<mosaic_0001>
module attributes {stable_mosaic.version = 11 : i64} {
  func.func @mentor_kernel(%arg0: i32, %arg1: memref<1x512xf32, #tpu.memory_space<vmem>>, %arg2: memref<1x512xf32, #tpu.memory_space<vmem>>, %arg3: memref<32x2xf32, #tpu.memory_space<vmem>>, %arg4: memref<32x1xf32, #tpu.memory_space<vmem>>, %arg5: memref<32x1xf32, #tpu.memory_space<vmem>>, %arg6: memref<1x1xf32, #tpu.memory_space<vmem>>, %arg7: memref<1x512xf32, #tpu.memory_space<vmem>>) attributes {dimension_semantics = [#tpu.dimension_semantics<parallel>], iteration_bounds = array<i64: 2>, scalar_prefetch = 0 : i64, scratch_operands = 0 : i64, tpu.core_type = #tpu.core_type<tc>, window_params = [{transform_indices = @transform_0, window_bounds = array<i64: 1, 512>}, {transform_indices = @transform_1, window_bounds = array<i64: 1, 512>}, {pipeline_mode = #tpu.pipeline_mode<synchronous>, transform_indices = @transform_2, window_bounds = array<i64: 32, 2>}, {pipeline_mode = #tpu.pipeline_mode<synchronous>, transform_indices = @transform_3, window_bounds = array<i64: 32, 1>}, {pipeline_mode = #tpu.pipeline_mode<synchronous>, transform_indices = @transform_4, window_bounds = array<i64: 32, 1>}, {pipeline_mode = #tpu.pipeline_mode<synchronous>, transform_indices = @transform_5, window_bounds = array<i64: 1, 1>}, {transform_indices = @transform_6, window_bounds = array<i64: 1, 512>}]} {
    %c0 = arith.constant 0 : index
    %c0_0 = arith.constant 0 : index
    %0 = vector.load %arg3[%c0, %c0_0] : memref<32x2xf32, #tpu.memory_space<vmem>>, vector<32x1xf32>
    %c0_1 = arith.constant 0 : index
    %c1 = arith.constant 1 : index
    %1 = vector.load %arg3[%c0_1, %c1] : memref<32x2xf32, #tpu.memory_space<vmem>>, vector<32x1xf32>
    %c0_2 = arith.constant 0 : index
    %c0_3 = arith.constant 0 : index
    %2 = vector.load %arg4[%c0_2, %c0_3] : memref<32x1xf32, #tpu.memory_space<vmem>>, vector<32x1xf32>
    %c0_4 = arith.constant 0 : index
    %c0_5 = arith.constant 0 : index
    %3 = vector.load %arg5[%c0_4, %c0_5] : memref<32x1xf32, #tpu.memory_space<vmem>>, vector<32x1xf32>
    %c0_6 = arith.constant 0 : index
    %c0_7 = arith.constant 0 : index
    %4 = vector.load %arg6[%c0_6, %c0_7] : memref<1x1xf32, #tpu.memory_space<vmem>>, vector<1x1xf32>
    %c0_i32 = arith.constant 0 : i32
    %c512_i32 = arith.constant 512 : i32
    %5 = arith.muli %c0_i32, %c512_i32 : i32
    %6 = tpu.assume_multiple %5, 512 : i32
    %c0_8 = arith.constant 0 : index
    %7 = arith.index_cast %6 : i32 to index
    %8 = vector.load %arg1[%c0_8, %7] : memref<1x512xf32, #tpu.memory_space<vmem>>, vector<1x512xf32>
    %c0_9 = arith.constant 0 : index
    %9 = arith.index_cast %6 : i32 to index
    %10 = vector.load %arg2[%c0_9, %9] : memref<1x512xf32, #tpu.memory_space<vmem>>, vector<1x512xf32>
    %11 = vector.broadcast %0 : vector<32x1xf32> to vector<32x512xf32>
    %12 = vector.broadcast %8 : vector<1x512xf32> to vector<32x512xf32>
    %13 = arith.mulf %11, %12 : vector<32x512xf32>
    %14 = vector.broadcast %1 : vector<32x1xf32> to vector<32x512xf32>
    %15 = vector.broadcast %10 : vector<1x512xf32> to vector<32x512xf32>
    %16 = arith.mulf %14, %15 : vector<32x512xf32>
    %17 = arith.addf %13, %16 : vector<32x512xf32>
    %18 = vector.broadcast %2 : vector<32x1xf32> to vector<32x512xf32>
    %19 = arith.addf %17, %18 : vector<32x512xf32>
    %20 = math.tanh %19 : vector<32x512xf32>
    %21 = vector.broadcast %3 : vector<32x1xf32> to vector<32x512xf32>
    %22 = arith.mulf %21, %20 : vector<32x512xf32>
    %cst = arith.constant dense<0.000000e+00> : vector<512xf32>
    %23 = vector.multi_reduction <add>, %22, %cst [0] : vector<32x512xf32> to vector<512xf32>
    %24 = vector.shape_cast %23 : vector<512xf32> to vector<1x512xf32>
    %25 = vector.broadcast %4 : vector<1x1xf32> to vector<1x512xf32>
    %26 = arith.addf %24, %25 : vector<1x512xf32>
    %27 = arith.negf %26 : vector<1x512xf32>
    %28 = math.exp %27 : vector<1x512xf32>
    %cst_10 = arith.constant 1.000000e+00 : f32
    %29 = vector.broadcast %cst_10 : f32 to vector<1x512xf32>
    %30 = arith.addf %29, %28 : vector<1x512xf32>
    %31 = arith.divf %29, %30 : vector<1x512xf32>
    %c0_11 = arith.constant 0 : index
    %32 = arith.index_cast %6 : i32 to index
    %33 = vector.load %arg7[%c0_11, %32] : memref<1x512xf32, #tpu.memory_space<vmem>>, vector<1x512xf32>
    tpu.vector_store %arg7[%c0_11, %32], %31 {strides = array<i32>} : memref<1x512xf32, #tpu.memory_space<vmem>>, vector<1x512xf32>,
    %c1_i32 = arith.constant 1 : i32
    return
  }
  func.func @transform_0(%arg0: i32) -> (i32, i32) {
    %c0_i32 = arith.constant 0 : i32
    %c0_i32_0 = arith.constant 0 : i32
    return %c0_i32, %arg0 : i32, i32
  }
  func.func @transform_1(%arg0: i32) -> (i32, i32) {
    %c0_i32 = arith.constant 0 : i32
    %c0_i32_0 = arith.constant 0 : i32
    return %c0_i32, %arg0 : i32, i32
  }
  func.func @transform_2(%arg0: i32) -> (i32, i32) {
    %c0_i32 = arith.constant 0 : i32
    %c0_i32_0 = arith.constant 0 : i32
    %c0_i32_1 = arith.constant 0 : i32
    return %c0_i32, %c0_i32_0 : i32, i32
  }
  func.func @transform_3(%arg0: i32) -> (i32, i32) {
    %c0_i32 = arith.constant 0 : i32
    %c0_i32_0 = arith.constant 0 : i32
    %c0_i32_1 = arith.constant 0 : i32
    return %c0_i32, %c0_i32_0 : i32, i32
  }
  func.func @transform_4(%arg0: i32) -> (i32, i32) {
    %c0_i32 = arith.constant 0 : i32
    %c0_i32_0 = arith.constant 0 : i32
    %c0_i32_1 = arith.constant 0 : i32
    return %c0_i32, %c0_i32_0 : i32, i32
  }
  func.func @transform_5(%arg0: i32) -> (i32, i32) {
    %c0_i32 = arith.constant 0 : i32
    %c0_i32_0 = arith.constant 0 : i32
    %c0_i32_1 = arith.constant 0 : i32
    return %c0_i32, %c0_i32_0 : i32, i32
  }
  func.func @transform_6(%arg0: i32) -> (i32, i32) {
    %c0_i32 = arith.constant 0 : i32
    %c0_i32_0 = arith.constant 0 : i32
    return %c0_i32, %arg0 : i32, i32
  }
}

</mosaic_0001>

<llo_original>
// kernel: tpu_custom_call.1
$region0: #{tpu_custom_call.1}
  #allocation0 [shape = 'u32[]', space=smem, size = 0x4, offset = 0x4, fixed_abs, tag = 'smem constant byte address 0x4 - core index']
  #allocation1 [shape = 'u32[72,128]{1,0:T(1,128)}', space=vmem, size = 0x9000, scoped, tag = 'internal scratch']
  #allocation2 [shape = 'f32[1,1]{1,0:T(1,128)S(1)}', space=vmem, size = 0x200, scoped, tag = 'scoped memory for tpu_custom_call.1']
  %s0 = inlined_call_operand.vmem [shape: f32[1,1024], index: 0, kind: input, shape index: {}]
  %s1 = inlined_call_operand.vmem [shape: f32[1,1024], index: 1, kind: input, shape index: {}]
  %s2 = inlined_call_operand.vmem [shape: f32[32,2], index: 2, kind: input, shape index: {}]
  %s3 = inlined_call_operand.vmem [shape: f32[32,1], index: 3, kind: input, shape index: {}]
  %s4 = inlined_call_operand.vmem [shape: f32[32,1], index: 4, kind: input, shape index: {}]
  %s5 = inlined_call_operand.<no memory space> [shape: f32[1,1], index: 5, kind: input, shape index: {}]
  %s6 = inlined_call_operand.hbm [shape: f32[1,1024], index: 6, kind: output, shape index: {}]
  %s7 = sld [smem:[#allocation0]]
  $region57: #{tpu_custom_call.1} parent=0
    _
  %s9 = ssub.s32 1, %s7
  %s10 = scalar_select 0, %s9, %s7
  %v11 = vstv %s5
  %12 = vst [vmem:[#allocation2] sm:$0x1] %v11
  $region1: #{tpu_custom_call.1} parent=0
    #allocation3 [shape = 'u8[4096]{0}', space=vmem, size = 0x1000, scoped, tag = 'output window, operand 0']
    #allocation4 [shape = 's32[2]{0}', space=sflag, size = 0x8, scoped, tag = 'scoped memory for tpu_custom_call.1']
    %13 = vsyncpa [#allocation4], 0
    %s14 = scalar_lea.sflag [#allocation4], 1
    %15 = vsyncpa %s14, 0
    loop: start=0, step=1, limit=4
    $region2: #{tpu_custom_call.1} parent=1 // loop_pre_header
      _
    $region3: #{tpu_custom_call.1} parent=1 // loop_header
      %s17 = sphi 0, %s21
      %p18 = scmp.ge.s32.totalorder %s17, 4
      %s27 = sphi 0, %s29
      %s30 = sphi 0, %s27
      %s31 = sphi 0, %s30
      %s47 = sphi 0, %s31
      %s53 = sphi 0, %s55
      %s56 = sphi 0, %s53
      %s57 = sphi 0, %s56
      %s73 = sphi 0, %s57
      %s77 = sphi 0, %s77
      %s79 = sphi 0, %s77
      %s80 = sphi 0, %s79
      %s94 = sphi 0, %s80
      %s98 = sphi 0, %s98
      %s100 = sphi 0, %s98
      %s101 = sphi 0, %s100
      %s115 = sphi 0, %s101
      %s119 = sphi 0, %s119
      %s121 = sphi 0, %s119
      %s122 = sphi 0, %s121
      %s136 = sphi 0, %s122
      %s140 = sphi 0, %s140
      %s142 = sphi 0, %s140
      %s143 = sphi 0, %s142
      %s157 = sphi 0, %s143
      %s163 = sphi 0, %s165
      %s166 = sphi 0, %s163
      %s167 = sphi 0, %s166
      %s183 = sphi 0, %s167
    $region4: #{tpu_custom_call.1} parent=1 // loop_header_branch
      %20 = sbr.rel (%p18) target = $region8
    $region5: #{tpu_custom_call.1} parent=1 // loop_body
      %s22 = ssub.s32 %s17, 1
      %s23 = ssub.s32 %s17, 2
      %s24 = sadd.s32 %s17, 1
      %s25 = ssub.s32 %s17, %s24
      %p26 = scmp.eq.s32.totalorder %s25, 0
      %s28 = sadd.s32 %s27, 1
      %s29 = scalar_select %p26, %s27, %s28
      %p32 = pneg %p26
      %p33 = scmp.eq.s32.totalorder %s17, 1
      %p34 = por %p32, %p33
      %p35 = scmp.ne.s32.totalorder %s27, %s30
      %p36 = scmp.eq.s32.totalorder %s17, 0
      %p37 = por %p35, %p36
      %p38 = scmp.ne.s32.totalorder %s27, %s30
      %p39 = scmp.eq.s32.totalorder %s22, 1
      %p40 = por %p38, %p39
      %p41 = scmp.ne.s32.totalorder %s30, %s31
      %p42 = scmp.eq.s32.totalorder %s22, 0
      %p43 = por %p41, %p42
      %p44 = scmp.ne.s32.totalorder %s30, %s31
      %p45 = scmp.eq.s32.totalorder %s23, 1
      %p46 = por %p44, %p45
      %p48 = scmp.ne.s32.totalorder %s31, %s47
      %p49 = scmp.eq.s32.totalorder %s23, 0
      %p50 = por %p48, %p49
      %s51 = ssub.s32 %s17, %s24
      %p52 = scmp.eq.s32.totalorder %s51, 0
      %s54 = sadd.s32 %s53, 1
      %s55 = scalar_select %p52, %s53, %s54
      %p58 = pneg %p52
      %p59 = scmp.eq.s32.totalorder %s17, 1
      %p60 = por %p58, %p59
      %p61 = scmp.ne.s32.totalorder %s53, %s56
      %p62 = scmp.eq.s32.totalorder %s17, 0
      %p63 = por %p61, %p62
      %p64 = scmp.ne.s32.totalorder %s53, %s56
      %p65 = scmp.eq.s32.totalorder %s22, 1
      %p66 = por %p64, %p65
      %p67 = scmp.ne.s32.totalorder %s56, %s57
      %p68 = scmp.eq.s32.totalorder %s22, 0
      %p69 = por %p67, %p68
      %p70 = scmp.ne.s32.totalorder %s56, %s57
      %p71 = scmp.eq.s32.totalorder %s23, 1
      %p72 = por %p70, %p71
      %p74 = scmp.ne.s32.totalorder %s57, %s73
      %p75 = scmp.eq.s32.totalorder %s23, 0
      %p76 = por %p74, %p75
      %s78 = sadd.s32 %s77, 1
      %p81 = scmp.eq.s32.totalorder %s17, 1
      %p82 = scmp.ne.s32.totalorder %s77, %s79
      %p83 = scmp.eq.s32.totalorder %s17, 0
      %p84 = por %p82, %p83
      %p85 = scmp.ne.s32.totalorder %s77, %s79
      %p86 = scmp.eq.s32.totalorder %s22, 1
      %p87 = por %p85, %p86
      %p88 = scmp.ne.s32.totalorder %s79, %s80
      %p89 = scmp.eq.s32.totalorder %s22, 0
      %p90 = por %p88, %p89
      %p91 = scmp.ne.s32.totalorder %s79, %s80
      %p92 = scmp.eq.s32.totalorder %s23, 1
      %p93 = por %p91, %p92
      %p95 = scmp.ne.s32.totalorder %s80, %s94
      %p96 = scmp.eq.s32.totalorder %s23, 0
      %p97 = por %p95, %p96
      %s99 = sadd.s32 %s98, 1
      %p102 = scmp.eq.s32.totalorder %s17, 1
      %p103 = scmp.ne.s32.totalorder %s98, %s100
      %p104 = scmp.eq.s32.totalorder %s17, 0
      %p105 = por %p103, %p104
      %p106 = scmp.ne.s32.totalorder %s98, %s100
      %p107 = scmp.eq.s32.totalorder %s22, 1
      %p108 = por %p106, %p107
      %p109 = scmp.ne.s32.totalorder %s100, %s101
      %p110 = scmp.eq.s32.totalorder %s22, 0
      %p111 = por %p109, %p110
      %p112 = scmp.ne.s32.totalorder %s100, %s101
      %p113 = scmp.eq.s32.totalorder %s23, 1
      %p114 = por %p112, %p113
      %p116 = scmp.ne.s32.totalorder %s101, %s115
      %p117 = scmp.eq.s32.totalorder %s23, 0
      %p118 = por %p116, %p117
      %s120 = sadd.s32 %s119, 1
      %p123 = scmp.eq.s32.totalorder %s17, 1
      %p124 = scmp.ne.s32.totalorder %s119, %s121
      %p125 = scmp.eq.s32.totalorder %s17, 0
      %p126 = por %p124, %p125
      %p127 = scmp.ne.s32.totalorder %s119, %s121
      %p128 = scmp.eq.s32.totalorder %s22, 1
      %p129 = por %p127, %p128
      %p130 = scmp.ne.s32.totalorder %s121, %s122
      %p131 = scmp.eq.s32.totalorder %s22, 0
      %p132 = por %p130, %p131
      %p133 = scmp.ne.s32.totalorder %s121, %s122
      %p134 = scmp.eq.s32.totalorder %s23, 1
      %p135 = por %p133, %p134
      %p137 = scmp.ne.s32.totalorder %s122, %s136
      %p138 = scmp.eq.s32.totalorder %s23, 0
      %p139 = por %p137, %p138
      %s141 = sadd.s32 %s140, 1
      %p144 = scmp.eq.s32.totalorder %s17, 1
      %p145 = scmp.ne.s32.totalorder %s140, %s142
      %p146 = scmp.eq.s32.totalorder %s17, 0
      %p147 = por %p145, %p146
      %p148 = scmp.ne.s32.totalorder %s140, %s142
      %p149 = scmp.eq.s32.totalorder %s22, 1
      %p150 = por %p148, %p149
      %p151 = scmp.ne.s32.totalorder %s142, %s143
      %p152 = scmp.eq.s32.totalorder %s22, 0
      %p153 = por %p151, %p152
      %p154 = scmp.ne.s32.totalorder %s142, %s143
      %p155 = scmp.eq.s32.totalorder %s23, 1
      %p156 = por %p154, %p155
      %p158 = scmp.ne.s32.totalorder %s143, %s157
      %p159 = scmp.eq.s32.totalorder %s23, 0
      %p160 = por %p158, %p159
      %s161 = ssub.s32 %s17, %s24
      %p162 = scmp.eq.s32.totalorder %s161, 0
      %s164 = sadd.s32 %s163, 1
      %s165 = scalar_select %p162, %s163, %s164
      %p168 = pneg %p162
      %p169 = scmp.eq.s32.totalorder %s17, 1
      %p170 = por %p168, %p169
      %p171 = scmp.ne.s32.totalorder %s163, %s166
      %p172 = scmp.eq.s32.totalorder %s17, 0
      %p173 = por %p171, %p172
      %p174 = scmp.ne.s32.totalorder %s163, %s166
      %p175 = scmp.eq.s32.totalorder %s22, 1
      %p176 = por %p174, %p175
      %p177 = scmp.ne.s32.totalorder %s166, %s167
      %p178 = scmp.eq.s32.totalorder %s22, 0
      %p179 = por %p177, %p178
      %p180 = scmp.ne.s32.totalorder %s166, %s167
      %p181 = scmp.eq.s32.totalorder %s23, 1
      %p182 = por %p180, %p181
      %p184 = scmp.ne.s32.totalorder %s167, %s183
      %p185 = scmp.eq.s32.totalorder %s23, 0
      %p186 = por %p184, %p185
      %p187 = scmp.le.s32.totalorder 1, %s17
      %p188 = scmp.lt.s32.totalorder %s17, 3
      %p189 = pnand %p187, %p188
      %p190 = pneg %p189
      // Predicated region
      $region9: #{tpu_custom_call.1} parent=5 // pred_check
        _
      $region10: #{tpu_custom_call.1} parent=5 // pred_check_branch
        %192 = sbr.rel (%p189) target = $region12
      $region11: #{tpu_custom_call.1} parent=5 // pred_region
        %s193 = ssub.s32 %s17, 1
        // Predicated region
        $region13: #{tpu_custom_call.1} parent=11 // pred_check
          %p194 = pneg %p90
        $region14: #{tpu_custom_call.1} parent=11 // pred_check_branch
          %196 = sbr.rel (%p194) target = $region16
        $region15: #{tpu_custom_call.1} parent=11 // pred_region
          _
        $region16: #{tpu_custom_call.1} parent=11 // pred_fallthru
          _
        // Predicated region
        $region17: #{tpu_custom_call.1} parent=11 // pred_check
          %p197 = pneg %p111
        $region18: #{tpu_custom_call.1} parent=11 // pred_check_branch
          %199 = sbr.rel (%p197) target = $region20
        $region19: #{tpu_custom_call.1} parent=11 // pred_region
          _
        $region20: #{tpu_custom_call.1} parent=11 // pred_fallthru
          _
        // Predicated region
        $region21: #{tpu_custom_call.1} parent=11 // pred_check
          %p200 = pneg %p132
        $region22: #{tpu_custom_call.1} parent=11 // pred_check_branch
          %202 = sbr.rel (%p200) target = $region24
        $region23: #{tpu_custom_call.1} parent=11 // pred_region
          _
        $region24: #{tpu_custom_call.1} parent=11 // pred_fallthru
          _
        // Predicated region
        $region25: #{tpu_custom_call.1} parent=11 // pred_check
          %p203 = pneg %p153
        $region26: #{tpu_custom_call.1} parent=11 // pred_check_branch
          %205 = sbr.rel (%p203) target = $region28
        $region27: #{tpu_custom_call.1} parent=11 // pred_region
          _
        $region28: #{tpu_custom_call.1} parent=11 // pred_fallthru
          _
      $region12: #{tpu_custom_call.1} parent=5 // pred_fallthru
        _
      %p206 = scmp.lt.s32.totalorder %s17, 2
      // Predicated region
      $region29: #{tpu_custom_call.1} parent=5 // pred_check
        %p207 = pneg %p206
      $region30: #{tpu_custom_call.1} parent=5 // pred_check_branch
        %209 = sbr.rel (%p207) target = $region32
      $region31: #{tpu_custom_call.1} parent=5 // pred_region
        // Predicated region
        $region33: #{tpu_custom_call.1} parent=31 // pred_check
          %p210 = pneg %p37
        $region34: #{tpu_custom_call.1} parent=31 // pred_check_branch
          %212 = sbr.rel (%p210) target = $region36
        $region35: #{tpu_custom_call.1} parent=31 // pred_region
          %s213 = smul.u32 4, %s17
          %p214 = scmp.lt.s32.totalorder %s213, 7
          %s215 = scalar_select %p214, %s213, 7
          %s216 = scalar_lea.vmem %s0, %s215
          %s217 = smul.u32 4, %s17
        $region36: #{tpu_custom_call.1} parent=31 // pred_fallthru
          _
        // Predicated region
        $region37: #{tpu_custom_call.1} parent=31 // pred_check
          %p218 = pneg %p63
        $region38: #{tpu_custom_call.1} parent=31 // pred_check_branch
          %220 = sbr.rel (%p218) target = $region40
        $region39: #{tpu_custom_call.1} parent=31 // pred_region
          %s221 = smul.u32 4, %s17
          %p222 = scmp.lt.s32.totalorder %s221, 7
          %s223 = scalar_select %p222, %s221, 7
          %s224 = scalar_lea.vmem %s1, %s223
          %s225 = smul.u32 4, %s17
        $region40: #{tpu_custom_call.1} parent=31 // pred_fallthru
          _
      $region32: #{tpu_custom_call.1} parent=5 // pred_fallthru
        _
      %p226 = scmp.le.s32.totalorder 1, %s17
      %p227 = scmp.lt.s32.totalorder %s17, 3
      %p228 = pnand %p226, %p227
      %p229 = pneg %p228
      // Predicated region
      $region41: #{tpu_custom_call.1} parent=5 // pred_check
        _
      $region42: #{tpu_custom_call.1} parent=5 // pred_check_branch
        %231 = sbr.rel (%p228) target = $region44
      $region43: #{tpu_custom_call.1} parent=5 // pred_region
        %s232 = ssub.s32 %s17, 1
        %s233 = smul.u32 4, %s22
        %p234 = scmp.lt.s32.totalorder %s233, 7
        %s235 = scalar_select %p234, %s233, 7
        %s236 = scalar_lea.vmem %s0, %s235
        %p237 = pneg %p43
        %p238 = pneg %p40
        %s239 = smul.u32 4, %s22
        %p240 = scmp.lt.s32.totalorder %s239, 7
        %s241 = scalar_select %p240, %s239, 7
        %s242 = scalar_lea.vmem %s1, %s241
        %p243 = pneg %p69
        %p244 = pneg %p66
        %p245 = pneg %p90
        %p246 = pneg %p87
        %p247 = pneg %p111
        %p248 = pneg %p108
        %p249 = pneg %p132
        %p250 = pneg %p129
        %p251 = pneg %p153
        %p252 = pneg %p150
        %p253 = pneg %p179
        %p254 = pneg %p176
        %s255 = sand.u32 %s166, 1
        %s256 = scalar_lea.sflag [#allocation4], %s255
        %s257 = sand.u32 %s166, 1
        %s258 = smul.addr %s257, 4
        %s259 = scalar_lea.vmem [#allocation3], %s258
        %s260 = smul.u32 4, %s22
        %p261 = scmp.lt.s32.totalorder %s260, 7
        %s262 = scalar_select %p261, %s260, 7
        %s263 = scalar_lea.vmem %s0, %s262
        %s264 = smul.u32 4, %s22
        %s265 = smul.u32 4, %s22
        %p266 = scmp.lt.s32.totalorder %s265, 7
        %s267 = scalar_select %p266, %s265, 7
        %s268 = scalar_lea.vmem %s1, %s267
        %s269 = smul.u32 4, %s22
        %s270 = smul.u32 4, %s22
        %v271 = vld [vmem:[%s2] sm:$0xff]
        %v272 = vld [vmem:[%s2 + $0x8] sm:$0xff]
        %v273 = vld [vmem:[%s2 + $0x10] sm:$0xff]
        %v274 = vld [vmem:[%s2 + $0x18] sm:$0xff]
        %v275 = vld [vmem:[%s3] sm:$0xff]
        %v276 = vld [vmem:[%s3 + $0x8] sm:$0xff]
        %v277 = vld [vmem:[%s3 + $0x10] sm:$0xff]
        %v278 = vld [vmem:[%s3 + $0x18] sm:$0xff]
        %v279 = vld [vmem:[%s4] sm:$0xff]
        %v280 = vld [vmem:[%s4 + $0x8] sm:$0xff]
        %v281 = vld [vmem:[%s4 + $0x10] sm:$0xff]
        %v282 = vld [vmem:[%s4 + $0x18] sm:$0xff]
        %v283 = vld [vmem:[#allocation2] sm:$0x1]
        %v284 = vld [vmem:[%s263] sm:$0xf]
        %v285 = vld [vmem:[%s268] sm:$0xf]
        %287 = vset.pattern.permute.xlu0 0
        %288 = vperm.xlu0 %287, %v271
        %v289 = vpop.permute.xlu0 %288
        %292 = vset.pattern.permute.xlu0 0
        %293 = vperm.xlu0 %292, %v272
        %v294 = vpop.permute.xlu0 %293
        %297 = vset.pattern.permute.xlu0 0
        %298 = vperm.xlu0 %297, %v273
        %v299 = vpop.permute.xlu0 %298
        %302 = vset.pattern.permute.xlu0 0
        %303 = vperm.xlu0 %302, %v274
        %v304 = vpop.permute.xlu0 %303
        %v307 = vperm.slane %v284, 0
        %v308 = vperm.slane %v284, 1
        %v309 = vperm.slane %v284, 2
        %v310 = vperm.slane %v284, 3
        %v315 = vmul.f32 %v289, %v307
        %v316 = vmul.f32 %v289, %v308
        %v317 = vmul.f32 %v289, %v309
        %v318 = vmul.f32 %v289, %v310
        %v319 = vmul.f32 %v294, %v307
        %v320 = vmul.f32 %v294, %v308
        %v321 = vmul.f32 %v294, %v309
        %v322 = vmul.f32 %v294, %v310
        %v323 = vmul.f32 %v299, %v307
        %v324 = vmul.f32 %v299, %v308
        %v325 = vmul.f32 %v299, %v309
        %v326 = vmul.f32 %v299, %v310
        %v327 = vmul.f32 %v304, %v307
        %v328 = vmul.f32 %v304, %v308
        %v329 = vmul.f32 %v304, %v309
        %v330 = vmul.f32 %v304, %v310
        %331 = vset.pattern.permute.xlu0 1
        %332 = vperm.xlu0 %331, %v271
        %v333 = vpop.permute.xlu0 %332
        %335 = vset.pattern.permute.xlu0 1
        %336 = vperm.xlu0 %335, %v272
        %v337 = vpop.permute.xlu0 %336
        %339 = vset.pattern.permute.xlu0 1
        %340 = vperm.xlu0 %339, %v273
        %v341 = vpop.permute.xlu0 %340
        %343 = vset.pattern.permute.xlu0 1
        %344 = vperm.xlu0 %343, %v274
        %v345 = vpop.permute.xlu0 %344
        %v348 = vperm.slane %v285, 0
        %v349 = vperm.slane %v285, 1
        %v350 = vperm.slane %v285, 2
        %v351 = vperm.slane %v285, 3
        %v356 = vmul.f32 %v333, %v348
        %v357 = vmul.f32 %v333, %v349
        %v358 = vmul.f32 %v333, %v350
        %v359 = vmul.f32 %v333, %v351
        %v360 = vmul.f32 %v337, %v348
        %v361 = vmul.f32 %v337, %v349
        %v362 = vmul.f32 %v337, %v350
        %v363 = vmul.f32 %v337, %v351
        %v364 = vmul.f32 %v341, %v348
        %v365 = vmul.f32 %v341, %v349
        %v366 = vmul.f32 %v341, %v350
        %v367 = vmul.f32 %v341, %v351
        %v368 = vmul.f32 %v345, %v348
        %v369 = vmul.f32 %v345, %v349
        %v370 = vmul.f32 %v345, %v350
        %v371 = vmul.f32 %v345, %v351
        %v372 = vadd.f32 %v315, %v356
        %v373 = vadd.f32 %v316, %v357
        %v374 = vadd.f32 %v317, %v358
        %v375 = vadd.f32 %v318, %v359
        %v376 = vadd.f32 %v319, %v360
        %v377 = vadd.f32 %v320, %v361
        %v378 = vadd.f32 %v321, %v362
        %v379 = vadd.f32 %v322, %v363
        %v380 = vadd.f32 %v323, %v364
        %v381 = vadd.f32 %v324, %v365
        %v382 = vadd.f32 %v325, %v366
        %v383 = vadd.f32 %v326, %v367
        %v384 = vadd.f32 %v327, %v368
        %v385 = vadd.f32 %v328, %v369
        %v386 = vadd.f32 %v329, %v370
        %v387 = vadd.f32 %v330, %v371
        %389 = vset.pattern.permute.xlu0 0
        %390 = vperm.xlu0 %389, %v275
        %v391 = vpop.permute.xlu0 %390
        %394 = vset.pattern.permute.xlu0 0
        %395 = vperm.xlu0 %394, %v276
        %v396 = vpop.permute.xlu0 %395
        %399 = vset.pattern.permute.xlu0 0
        %400 = vperm.xlu0 %399, %v277
        %v401 = vpop.permute.xlu0 %400
        %404 = vset.pattern.permute.xlu0 0
        %405 = vperm.xlu0 %404, %v278
        %v406 = vpop.permute.xlu0 %405
        %v408 = vadd.f32 %v372, %v391
        %v409 = vadd.f32 %v373, %v391
        %v410 = vadd.f32 %v374, %v391
        %v411 = vadd.f32 %v375, %v391
        %v412 = vadd.f32 %v376, %v396
        %v413 = vadd.f32 %v377, %v396
        %v414 = vadd.f32 %v378, %v396
        %v415 = vadd.f32 %v379, %v396
        %v416 = vadd.f32 %v380, %v401
        %v417 = vadd.f32 %v381, %v401
        %v418 = vadd.f32 %v382, %v401
        %v419 = vadd.f32 %v383, %v401
        %v420 = vadd.f32 %v384, %v406
        %v421 = vadd.f32 %v385, %v406
        %v422 = vadd.f32 %v386, %v406
        %v423 = vadd.f32 %v387, %v406
        %v424 = vtanh.pop %v408
        %v425 = vtanh.pop %v409
        %v426 = vtanh.pop %v410
        %v427 = vtanh.pop %v411
        %v428 = vtanh.pop %v412
        %v429 = vtanh.pop %v413
        %v430 = vtanh.pop %v414
        %v431 = vtanh.pop %v415
        %v432 = vtanh.pop %v416
        %v433 = vtanh.pop %v417
        %v434 = vtanh.pop %v418
        %v435 = vtanh.pop %v419
        %v436 = vtanh.pop %v420
        %v437 = vtanh.pop %v421
        %v438 = vtanh.pop %v422
        %v439 = vtanh.pop %v423
        %441 = vset.pattern.permute.xlu0 0
        %442 = vperm.xlu0 %441, %v279
        %v443 = vpop.permute.xlu0 %442
        %446 = vset.pattern.permute.xlu0 0
        %447 = vperm.xlu0 %446, %v280
        %v448 = vpop.permute.xlu0 %447
        %451 = vset.pattern.permute.xlu0 0
        %452 = vperm.xlu0 %451, %v281
        %v453 = vpop.permute.xlu0 %452
        %456 = vset.pattern.permute.xlu0 0
        %457 = vperm.xlu0 %456, %v282
        %v458 = vpop.permute.xlu0 %457
        %v460 = vmul.f32 %v443, %v424
        %v461 = vmul.f32 %v443, %v425
        %v462 = vmul.f32 %v443, %v426
        %v463 = vmul.f32 %v443, %v427
        %v464 = vmul.f32 %v448, %v428
        %v465 = vmul.f32 %v448, %v429
        %v466 = vmul.f32 %v448, %v430
        %v467 = vmul.f32 %v448, %v431
        %v468 = vmul.f32 %v453, %v432
        %v469 = vmul.f32 %v453, %v433
        %v470 = vmul.f32 %v453, %v434
        %v471 = vmul.f32 %v453, %v435
        %v472 = vmul.f32 %v458, %v436
        %v473 = vmul.f32 %v458, %v437
        %v474 = vmul.f32 %v458, %v438
        %v475 = vmul.f32 %v458, %v439
        %v476 = vadd.f32 %v460, %v464
        %v477 = vadd.f32 %v476, %v468
        %v478 = vadd.f32 %v477, %v472
        %v479 = vrot.slane %v478, 4
        %v480 = vadd.f32 %v478, %v479
        %v481 = vrot.slane %v480, 2
        %v482 = vadd.f32 %v480, %v481
        %v483 = vrot.slane %v482, 1
        %v484 = vadd.f32 %v482, %v483
        %v485 = vadd.f32 %v461, %v465
        %v486 = vadd.f32 %v485, %v469
        %v487 = vadd.f32 %v486, %v473
        %v488 = vrot.slane %v487, 4
        %v489 = vadd.f32 %v487, %v488
        %v490 = vrot.slane %v489, 2
        %v491 = vadd.f32 %v489, %v490
        %v492 = vrot.slane %v491, 1
        %v493 = vadd.f32 %v491, %v492
        %v494 = vadd.f32 %v462, %v466
        %v495 = vadd.f32 %v494, %v470
        %v496 = vadd.f32 %v495, %v474
        %v497 = vrot.slane %v496, 4
        %v498 = vadd.f32 %v496, %v497
        %v499 = vrot.slane %v498, 2
        %v500 = vadd.f32 %v498, %v499
        %v501 = vrot.slane %v500, 1
        %v502 = vadd.f32 %v500, %v501
        %v503 = vadd.f32 %v463, %v467
        %v504 = vadd.f32 %v503, %v471
        %v505 = vadd.f32 %v504, %v475
        %v506 = vrot.slane %v505, 4
        %v507 = vadd.f32 %v505, %v506
        %v508 = vrot.slane %v507, 2
        %v509 = vadd.f32 %v507, %v508
        %v510 = vrot.slane %v509, 1
        %v511 = vadd.f32 %v509, %v510
        %513 = vset.pattern.permute.xlu0 0
        %514 = vperm.xlu0 %513, %v283
        %v515 = vpop.permute.xlu0 %514
        %v517 = vperm.slane %v515, 0
        %v518 = vadd.f32 %v484, %v517
        %v519 = vadd.f32 %v493, %v517
        %v520 = vadd.f32 %v502, %v517
        %v521 = vadd.f32 %v511, %v517
        %v522 = vxor.u32 %v518, 2147483648
        %v523 = vxor.u32 %v519, 2147483648
        %v524 = vxor.u32 %v520, 2147483648
        %v525 = vxor.u32 %v521, 2147483648
        %v526 = vmul.f32 %v522, 1.442695
        %v527 = vpow.pop %v526
        %v528 = vmul.f32 %v523, 1.442695
        %v529 = vpow.pop %v528
        %v530 = vmul.f32 %v524, 1.442695
        %v531 = vpow.pop %v530
        %v532 = vmul.f32 %v525, 1.442695
        %v533 = vpow.pop %v532
        %v534 = vadd.f32 %v527, 1.0
        %v535 = vadd.f32 %v529, 1.0
        %v536 = vadd.f32 %v531, 1.0
        %v537 = vadd.f32 %v533, 1.0
        %v538 = vrcp.pop %v534
        %v539 = vmul.f32 %v534, %v538
        %v540 = vsub.f32 1.0, %v539
        %v541 = vmul.f32 %v538, %v540
        %v542 = vadd.f32 %v538, %v541
        %vm543 = vweird.f32 %v534
        %vm544 = vweird.f32 %v538
        %vm545 = vmor %vm543, %vm544
        %v546 = vsel %vm545, %v538, %v542
        %v547 = vand.u32 2147483647, %v534
        %vm548 = vcmp.eq.f32.partialorder %v547, 8.507059e+37
        %v549 = vand.u32 %v534, 2147483648
        %v550 = vor.u32 1.1754944e-38, %v549
        %v551 = vsel %vm548, %v550, %v546
        %v552 = vmul.f32 1.0, %v551
        %v553 = vrcp.pop %v535
        %v554 = vmul.f32 %v535, %v553
        %v555 = vsub.f32 1.0, %v554
        %v556 = vmul.f32 %v553, %v555
        %v557 = vadd.f32 %v553, %v556
        %vm558 = vweird.f32 %v535
        %vm559 = vweird.f32 %v553
        %vm560 = vmor %vm558, %vm559
        %v561 = vsel %vm560, %v553, %v557
        %v562 = vand.u32 2147483647, %v535
        %vm563 = vcmp.eq.f32.partialorder %v562, 8.507059e+37
        %v564 = vand.u32 %v535, 2147483648
        %v565 = vor.u32 1.1754944e-38, %v564
        %v566 = vsel %vm563, %v565, %v561
        %v567 = vmul.f32 1.0, %v566
        %v568 = vrcp.pop %v536
        %v569 = vmul.f32 %v536, %v568
        %v570 = vsub.f32 1.0, %v569
        %v571 = vmul.f32 %v568, %v570
        %v572 = vadd.f32 %v568, %v571
        %vm573 = vweird.f32 %v536
        %vm574 = vweird.f32 %v568
        %vm575 = vmor %vm573, %vm574
        %v576 = vsel %vm575, %v568, %v572
        %v577 = vand.u32 2147483647, %v536
        %vm578 = vcmp.eq.f32.partialorder %v577, 8.507059e+37
        %v579 = vand.u32 %v536, 2147483648
        %v580 = vor.u32 1.1754944e-38, %v579
        %v581 = vsel %vm578, %v580, %v576
        %v582 = vmul.f32 1.0, %v581
        %v583 = vrcp.pop %v537
        %v584 = vmul.f32 %v537, %v583
        %v585 = vsub.f32 1.0, %v584
        %v586 = vmul.f32 %v583, %v585
        %v587 = vadd.f32 %v583, %v586
        %vm588 = vweird.f32 %v537
        %vm589 = vweird.f32 %v583
        %vm590 = vmor %vm588, %vm589
        %v591 = vsel %vm590, %v583, %v587
        %v592 = vand.u32 2147483647, %v537
        %vm593 = vcmp.eq.f32.partialorder %v592, 8.507059e+37
        %v594 = vand.u32 %v537, 2147483648
        %v595 = vor.u32 1.1754944e-38, %v594
        %v596 = vsel %vm593, %v595, %v591
        %v597 = vmul.f32 1.0, %v596
        %v602 = vrot.slane %v567, 7
        %v603 = vrot.slane %v582, 6
        %v604 = vrot.slane %v597, 5
        %vm605 = vcmask 1040384
        %v606 = vsel %vm605, %v552, %v602
        %vm607 = vcmask 1042434
        %v608 = vsel %vm607, %v603, %v604
        %vm609 = vcmask 1041408
        %v610 = vsel %vm609, %v606, %v608
        %v612 = vlaneseq
        %vm613 = vcmp.ge.s32.totalorder %v612, 0
        %vm614 = vcmp.lt.s32.totalorder %v612, 512
        %vm615 = vmand %vm613, %vm614
        %616 = vst.msk [vmem:[%s259] sm:$0xf] %vm615, %v610
        %s617 = sand.u32 %s166, 1
        %s618 = scalar_lea.sflag [#allocation4], %s617
        %s619 = sand.u32 %s166, 1
        %s620 = smul.addr %s619, 4
        %s621 = scalar_lea.vmem [#allocation3], %s620
        // Predicated region
        $region45: #{tpu_custom_call.1} parent=43 // pred_check
          %p622 = pneg %p176
        $region46: #{tpu_custom_call.1} parent=43 // pred_check_branch
          %624 = sbr.rel (%p622) target = $region48
        $region47: #{tpu_custom_call.1} parent=43 // pred_region
          %s625 = smul.u32 4, %s22
          %627 = vsyncadd %s618, 0
          %s628 = scalar_lea.hbm %s6, %s625
          %s630 = sshll.u32 %s621, 4
          %s631 = int_to_ptr.vmem [resolvable:$true] %s630
          %s632 = sshll.u32 %s628, 4
          %s633 = int_to_ptr.hbm [resolvable:$true] %s632
          %635 = dma.vmem_to_hbm [thread:$0]  %s631, 64, %s633, %s618
        $region48: #{tpu_custom_call.1} parent=43 // pred_fallthru
          _
      $region44: #{tpu_custom_call.1} parent=5 // pred_fallthru
        _
      %p636 = scmp.le.s32.totalorder 2, %s17
      // Predicated region
      $region49: #{tpu_custom_call.1} parent=5 // pred_check
        %p637 = pneg %p636
      $region50: #{tpu_custom_call.1} parent=5 // pred_check_branch
        %639 = sbr.rel (%p637) target = $region52
      $region51: #{tpu_custom_call.1} parent=5 // pred_region
        %s640 = ssub.s32 %s17, 2
        // Predicated region
        $region53: #{tpu_custom_call.1} parent=51 // pred_check
          %p641 = pneg %p182
        $region54: #{tpu_custom_call.1} parent=51 // pred_check_branch
          %643 = sbr.rel (%p641) target = $region56
        $region55: #{tpu_custom_call.1} parent=51 // pred_region
          %s644 = sand.u32 %s167, 1
          %s645 = scalar_lea.sflag [#allocation4], %s644
          %s646 = sand.u32 %s167, 1
          %s647 = smul.addr %s646, 4
          %s648 = scalar_lea.vmem [#allocation3], %s647
          %650 = dma.done %s645, 64
        $region56: #{tpu_custom_call.1} parent=51 // pred_fallthru
          _
      $region52: #{tpu_custom_call.1} parent=5 // pred_fallthru
        _
    $region6: #{tpu_custom_call.1} parent=1 // loop_footer
      %s21 = sadd.s32 1, %s17
    $region7: #{tpu_custom_call.1} parent=1 // loop_footer_branch
      %16 = sbr.rel target = $region3
    $region8: #{tpu_custom_call.1} parent=1 // loop_exit
      _
    %651 = vsyncpa [#allocation4], 1
    %s652 = scalar_lea.sflag [#allocation4], 1
    %653 = vsyncpa %s652, 1

</llo_original>
